<compile_context>
chip_gen: v7x
topology: tpu7x:2x2x1
jax: 0.10.0
libtpu: 0.0.40
codegen_flags: <defaults>
</compile_context>

<pallas_src>
import numpy as np
import jax
import jax.numpy as jnp
from jax import lax
from jax.experimental import pallas as pl
from jax.experimental.pallas import tpu as pltpu


ARCH = {
    "contrastive": {
        "max_samples": 1024,
        "max_views": 16,
        "temperature": 0.1,
        "base_temperature": 0.07,
        "loss_w": [0],          # labels to ignore (the module stores this as `ignore_label`)
        "loss_weight": 1.0,
        "with_embed": True,
    }
}


def _pick_tile(n, prefs):
    """Largest preferred tile that divides n; fall back to n (block == full dim)."""
    for t in prefs:
        if n % t == 0 and t <= n:
            return t
    return n


# --------------------- Kernel A: weighted NLL terms + per-pixel argmax (lane-dense) ---------------------
def _seg_argmax_kernel(logp_ref, lab_ref, w_ref, pred_ref, wnll_ref, wy_ref):
    logp = logp_ref[...]                           # (C, TN) f32 log-probs, pixels on lanes
    lab = lab_ref[...]                             # (1, TN) int32 targets
    w = w_ref[...]                                 # (C, 1)  f32 class weights
    C = logp.shape[0]

    cls = lax.broadcasted_iota(jnp.int32, logp.shape, 0)           # class id along sublanes
    onehot = (cls == lab).astype(jnp.float32)                      # (C, TN)
    picked = jnp.sum(logp * onehot, axis=0, keepdims=True)         # x[n, y_n]   (1, TN)
    wy = jnp.sum(w * onehot, axis=0, keepdims=True)                # w[y_n]      (1, TN)

    wnll_ref[...] = -(wy * picked)                                 # per-pixel weighted NLL
    wy_ref[...] = wy                                               # per-pixel weight

    # first-occurrence argmax over classes (== torch.max(outputs, 1))
    maxv = jnp.max(logp, axis=0, keepdims=True)
    pred = jnp.min(jnp.where(logp == maxv, cls, C), axis=0, keepdims=True)
    pred_ref[...] = pred.astype(jnp.int32)


def seg_loss_and_predict(logp_cn, labels_n, class_w):
    """logp_cn: (C, N) f32 log-probs; labels_n: (N,) int32; class_w: (C,) f32."""
    C, N = logp_cn.shape
    tile_n = _pick_tile(N, (8192, 4096, 2048, 1024, 512, 256, 128))
    assert N % tile_n == 0

    pred, wnll, wy = pl.pallas_call(
        _seg_argmax_kernel,
        grid=(N // tile_n,),
        in_specs=[
            pl.BlockSpec((C, tile_n), lambda i: (0, i)),   # log-probs (classes x pixels)
            pl.BlockSpec((1, tile_n), lambda i: (0, i)),   # labels (lane-dense)
            pl.BlockSpec((C, 1), lambda i: (0, 0)),        # class weights (resident)
        ],
        out_specs=[
            pl.BlockSpec((1, tile_n), lambda i: (0, i)),   # per-pixel argmax (lane-dense)
            pl.BlockSpec((1, tile_n), lambda i: (0, i)),   # per-pixel -w[y]*logp[y]
            pl.BlockSpec((1, tile_n), lambda i: (0, i)),   # per-pixel w[y]
        ],
        out_shape=[
            jax.ShapeDtypeStruct((1, N), jnp.int32),
            jax.ShapeDtypeStruct((1, N), jnp.float32),
            jax.ShapeDtypeStruct((1, N), jnp.float32),
        ],
        compiler_params=pltpu.CompilerParams(dimension_semantics=("parallel",)),
    )(logp_cn, labels_n.reshape(1, N).astype(jnp.int32), class_w.reshape(C, 1))

    seg_loss = jnp.sum(wnll) / jnp.sum(wy)
    return seg_loss, pred[0]


# --------------------------- Kernel B: supervised contrastive loss (tiled) ---------------------------
def _make_contrastive_kernel(temperature, base_temperature):
    inv_temp = 1.0 / temperature
    scale = temperature / base_temperature

    def kernel(anchor_ref, contrast_ref, lab_row_ref, lab_col_ref, out_ref):
        a = anchor_ref[...]                        # (tq, D) f32 anchor rows of this tile
        c = contrast_ref[...]                      # (T,  D) f32 full contrast set (resident)
        lr = lab_row_ref[...]                      # (tq, 1) int32 anchor labels
        lc = lab_col_ref[...]                      # (1,  T) int32 contrast labels (lane-dense)

        # anchor . contrast^T without an explicit transpose (contract on dim 1 of both)
        adc = lax.dot_general(
            a, c, dimension_numbers=(((1,), (1,)), ((), ())),
            preferred_element_type=jnp.float32) * inv_temp           # (tq, T)

        row_max = jnp.max(adc, axis=1, keepdims=True)
        logits = adc - row_max
        exp_logits = jnp.exp(logits)

        same = (lr == lc).astype(jnp.float32)                        # (tq, T), diagonal == 1
        all_sum = jnp.sum(exp_logits, axis=1, keepdims=True)
        pos_sum = jnp.sum(exp_logits * same, axis=1, keepdims=True)
        neg_sum = all_sum - pos_sum                                  # == sum(exp * (1 - same))

        log_prob = logits - jnp.log(exp_logits + neg_sum)            # (tq, T)

        # self-contrast (diagonal) term computed in closed form, (tq, 1):
        diag_logits = jnp.sum(a * a, axis=1, keepdims=True) * inv_temp - row_max
        diag_log_prob = diag_logits - jnp.log(jnp.exp(diag_logits) + neg_sum)

        pos_lp = jnp.sum(same * log_prob, axis=1, keepdims=True) - diag_log_prob
        pos_cnt = jnp.sum(same, axis=1, keepdims=True) - 1.0
        # guard degenerate rows with no same-class partner (would be NaN in the reference)
        mean_lpp = pos_lp / jnp.maximum(pos_cnt, 1.0)
        loss_row = -scale * mean_lpp                                 # (tq, 1)

        out_ref[...] = jnp.zeros((1, 1, 1), jnp.float32) + jnp.sum(loss_row)

    return kernel


def contrastive_loss(cf, big_labels, temperature, base_temperature):
    T, D = cf.shape
    tq = _pick_tile(T, (256, 128))
    G = T // tq

    partials = pl.pallas_call(
        _make_contrastive_kernel(temperature, base_temperature),
        grid=(G,),
        in_specs=[
            pl.BlockSpec((tq, D), lambda i: (i, 0)),     # anchor rows of this tile
            pl.BlockSpec((T, D), lambda i: (0, 0)),      # full contrast matrix, resident
            pl.BlockSpec((tq, 1), lambda i: (i, 0)),     # anchor labels
            pl.BlockSpec((1, T), lambda i: (0, 0)),      # contrast labels, lane-dense
        ],
        out_specs=pl.BlockSpec((1, 1, 1), lambda i: (i, 0, 0)),
        out_shape=jax.ShapeDtypeStruct((G, 1, 1), jnp.float32),
        compiler_params=pltpu.CompilerParams(dimension_semantics=("parallel",)),
    )(cf, cf,
      big_labels.reshape(T, 1).astype(jnp.int32),
      big_labels.reshape(1, T).astype(jnp.int32))

    return jnp.sum(partials) / T


# -------------------------------- host-side glue (dynamic shapes) --------------------------------
def nearest_resize_labels(labels, Hf, Wf):
    """PyTorch F.interpolate(mode='nearest') on integer labels."""
    B, H, W = labels.shape
    hi = (np.arange(Hf) * H) // Hf
    wi = (np.arange(Wf) * W) // Wf
    return labels[:, hi[:, None], wi[None, :]]


def hard_anchor_sampling_host(X, y_hat, y, max_samples, max_views, ignore_labels, seed=0):
    """X: (B, N, D), y_hat: (B, N) labels, y: (B, N) predictions. NumPy, dynamic shapes."""
    # TODO(synk): torch.unique/nonzero/randperm produce data-dependent shapes; kept on host
    # with a deterministic seeded permutation instead of torch.randperm.
    rng = np.random.RandomState(seed)
    B, _, D = X.shape
    classes, total = [], 0
    for ii in range(B):
        uniq = np.unique(y_hat[ii])
        cls = [int(c) for c in uniq if int(c) not in ignore_labels]
        cls = [c for c in cls if int(np.sum(y_hat[ii] == c)) > max_views]
        classes.append(cls)
        total += len(cls)
    if total == 0:
        return None, None
    n_view = min(max_samples // total, max_views)
    X_ = np.zeros((total, n_view, D), np.float32)
    y_ = np.zeros((total,), np.float32)
    ptr = 0
    for ii in range(B):
        for c in classes[ii]:
            hard = np.nonzero((y_hat[ii] == c) & (y[ii] != c))[0]
            easy = np.nonzero((y_hat[ii] == c) & (y[ii] == c))[0]
            nh, ne = len(hard), len(easy)
            if nh >= n_view / 2 and ne >= n_view / 2:
                nhk = n_view // 2
                nek = n_view - nhk
            elif nh >= n_view / 2:
                nek = ne
                nhk = n_view - nek
            elif ne >= n_view / 2:
                nhk = nh
                nek = n_view - nhk
            else:
                raise RuntimeError("this should never be touched")
            hard = hard[rng.permutation(nh)[:nhk]]
            easy = easy[rng.permutation(ne)[:nek]]
            idx = np.concatenate([hard, easy], axis=0)
            X_[ptr] = X[ii, idx, :]
            y_[ptr] = c
            ptr += 1
    return X_, y_


def contrast_ce_loss(feats, outputs, labels, class_w, arch):
    """feats: (B, D, Hf, Wf), outputs: (B, C, H, W) log-probs, labels: (B, H, W) int."""
    cfg = arch["contrastive"]
    B, C, H, W = outputs.shape
    _, D, Hf, Wf = feats.shape

    # ---- seg NLL loss + argmax predict (Pallas kernel A, lane-dense layout (C, N)) ----
    logp_cn = jnp.transpose(outputs, (1, 0, 2, 3)).reshape(C, B * H * W)
    labels_n = labels.reshape(B * H * W)
    seg_loss, pred = seg_loss_and_predict(logp_cn, labels_n, class_w)

    # ---- PixelContrastLoss preamble (host glue; layout work kept on device) ----
    feats_nhwc = jnp.transpose(feats, (0, 2, 3, 1)).reshape(B, Hf * Wf, D)
    pred_np = np.asarray(pred).reshape(B, H * W)
    lab_ds = nearest_resize_labels(np.asarray(labels), Hf, Wf).reshape(B, Hf * Wf)

    X_, y_ = hard_anchor_sampling_host(
        np.asarray(feats_nhwc), lab_ds, pred_np,
        cfg["max_samples"], cfg["max_views"], cfg["loss_w"])
    assert X_ is not None

    # contrast_feature = torch.cat(torch.unbind(X_, dim=1), dim=0)
    A, V, _ = X_.shape
    cf = np.ascontiguousarray(np.transpose(X_, (1, 0, 2)).reshape(A * V, D))
    big_labels = np.tile(y_, V)

    # ---- supervised contrastive loss (Pallas kernel B) ----
    contrast = contrastive_loss(jnp.asarray(cf), jnp.asarray(big_labels),
                                cfg["temperature"], cfg["base_temperature"])

    if cfg["with_embed"]:
        total = seg_loss + cfg["loss_weight"] * contrast
    else:
        total = seg_loss + 0.0 * contrast
    return total, seg_loss, contrast, cf, big_labels


# ------------------------------------------------ main ------------------------------------------------
if __name__ == "__main__":
    key = jax.random.PRNGKey(0)
    B, C, H, W = 2, 4, 16, 16
    D = 32
    Hf, Wf = H, W    # feats at label resolution (nearest resize still applied)

    k1, k2, k3 = jax.random.split(key, 3)
    logits = jax.random.normal(k1, (B, C, H, W), jnp.float32)
    outputs = jax.nn.log_softmax(logits, axis=1)                       # NLLLoss expects log-probs
    labels = jax.random.randint(k2, (B, H, W), 0, C, dtype=jnp.int32)
    feats = 0.05 * jax.random.normal(k3, (B, D, Hf, Wf), jnp.float32)
    class_w = jnp.array([0.5, 1.0, 1.5, 2.0], jnp.float32)             # NLLLoss per-class weights

    total, seg_loss, contrast, cf, big_labels = contrast_ce_loss(
        feats, outputs, labels, class_w, ARCH)
    total = jax.block_until_ready(total)

    # ---------- lightweight correctness checks against NumPy references ----------
    logp_np = np.asarray(jnp.transpose(outputs, (0, 2, 3, 1)).reshape(B * H * W, C))
    lab_np = np.asarray(labels).reshape(-1)
    w_np = np.asarray(class_w)
    num = -(w_np[lab_np] * logp_np[np.arange(lab_np.size), lab_np]).sum()
    den = w_np[lab_np].sum()
    seg_ref = num / den
    assert abs(float(seg_loss) - seg_ref) < 1e-3 * max(1.0, abs(seg_ref))

    temp = ARCH["contrastive"]["temperature"]
    base_temp = ARCH["contrastive"]["base_temperature"]
    adc = cf @ cf.T / temp
    lg = adc - adc.max(axis=1, keepdims=True)
    msk = (big_labels[:, None] == big_labels[None, :]).astype(np.float32)
    neg = 1.0 - msk
    np.fill_diagonal(msk, 0.0)
    ex = np.exp(lg)
    neg_sum = (ex * neg).sum(1, keepdims=True)
    lp = lg - np.log(ex + neg_sum)
    mlp = (msk * lp).sum(1) / msk.sum(1)
    c_ref = float((-(temp / base_temp) * mlp).mean())
    assert abs(float(contrast) - c_ref) < 3e-2 * max(1.0, abs(c_ref))

    assert np.isfinite(float(total))
    print("KERNEL_OK")
</pallas_src>

<mosaic_0001>
module attributes {stable_mosaic.version = 11 : i64} {
  func.func @_seg_argmax_kernel(%arg0: i32, %arg1: memref<4x512xf32, #tpu.memory_space<vmem>>, %arg2: memref<1x512xi32, #tpu.memory_space<vmem>>, %arg3: memref<4x1xf32, #tpu.memory_space<vmem>>, %arg4: memref<1x512xi32, #tpu.memory_space<vmem>>, %arg5: memref<1x512xf32, #tpu.memory_space<vmem>>, %arg6: memref<1x512xf32, #tpu.memory_space<vmem>>) attributes {dimension_semantics = [#tpu.dimension_semantics<parallel>], iteration_bounds = array<i64: 1>, scalar_prefetch = 0 : i64, scratch_operands = 0 : i64, tpu.core_type = #tpu.core_type<tc>, window_params = [{transform_indices = @transform_0, window_bounds = array<i64: 4, 512>}, {transform_indices = @transform_1, window_bounds = array<i64: 1, 512>}, {pipeline_mode = #tpu.pipeline_mode<synchronous>, transform_indices = @transform_2, window_bounds = array<i64: 4, 1>}, {transform_indices = @transform_3, window_bounds = array<i64: 1, 512>}, {transform_indices = @transform_4, window_bounds = array<i64: 1, 512>}, {transform_indices = @transform_5, window_bounds = array<i64: 1, 512>}]} {
    %c0 = arith.constant 0 : index
    %c0_0 = arith.constant 0 : index
    %0 = vector.load %arg1[%c0, %c0_0] : memref<4x512xf32, #tpu.memory_space<vmem>>, vector<4x512xf32>
    %c0_1 = arith.constant 0 : index
    %c0_2 = arith.constant 0 : index
    %1 = vector.load %arg2[%c0_1, %c0_2] : memref<1x512xi32, #tpu.memory_space<vmem>>, vector<1x512xi32>
    %c0_3 = arith.constant 0 : index
    %c0_4 = arith.constant 0 : index
    %2 = vector.load %arg3[%c0_3, %c0_4] : memref<4x1xf32, #tpu.memory_space<vmem>>, vector<4x1xf32>
    %3 = tpu.iota {dimensions = array<i32: 0>} : vector<4x512xi32>
    %4 = vector.broadcast %1 : vector<1x512xi32> to vector<4x512xi32>
    %5 = arith.cmpi eq, %3, %4 : vector<4x512xi32>
    %6 = arith.extui %5 : vector<4x512xi1> to vector<4x512xi32>
    %7 = arith.sitofp %6 : vector<4x512xi32> to vector<4x512xf32>
    %8 = arith.mulf %0, %7 : vector<4x512xf32>
    %cst = arith.constant dense<0.000000e+00> : vector<512xf32>
    %9 = vector.multi_reduction <add>, %8, %cst [0] : vector<4x512xf32> to vector<512xf32>
    %10 = vector.shape_cast %9 : vector<512xf32> to vector<1x512xf32>
    %11 = vector.broadcast %2 : vector<4x1xf32> to vector<4x512xf32>
    %12 = arith.mulf %11, %7 : vector<4x512xf32>
    %cst_5 = arith.constant dense<0.000000e+00> : vector<512xf32>
    %13 = vector.multi_reduction <add>, %12, %cst_5 [0] : vector<4x512xf32> to vector<512xf32>
    %14 = vector.shape_cast %13 : vector<512xf32> to vector<1x512xf32>
    %15 = arith.mulf %14, %10 : vector<1x512xf32>
    %cst_6 = arith.constant 0.000000e+00 : f32
    %16 = vector.broadcast %cst_6 : f32 to vector<1x512xf32>
    %17 = arith.subf %16, %15 : vector<1x512xf32>
    %c0_7 = arith.constant 0 : index
    %c0_8 = arith.constant 0 : index
    %18 = vector.load %arg5[%c0_7, %c0_8] : memref<1x512xf32, #tpu.memory_space<vmem>>, vector<1x512xf32>
    tpu.vector_store %arg5[%c0_7, %c0_8], %17 {strides = array<i32>} : memref<1x512xf32, #tpu.memory_space<vmem>>, vector<1x512xf32>,
    %c0_9 = arith.constant 0 : index
    %c0_10 = arith.constant 0 : index
    %19 = vector.load %arg6[%c0_9, %c0_10] : memref<1x512xf32, #tpu.memory_space<vmem>>, vector<1x512xf32>
    tpu.vector_store %arg6[%c0_9, %c0_10], %14 {strides = array<i32>} : memref<1x512xf32, #tpu.memory_space<vmem>>, vector<1x512xf32>,
    %cst_11 = arith.constant dense<0xFF800000> : vector<512xf32>
    %20 = vector.multi_reduction <maximumf>, %0, %cst_11 [0] : vector<4x512xf32> to vector<512xf32>
    %21 = vector.shape_cast %20 : vector<512xf32> to vector<1x512xf32>
    %22 = vector.broadcast %21 : vector<1x512xf32> to vector<4x512xf32>
    %23 = arith.cmpf oeq, %0, %22 : vector<4x512xf32>
    %c4_i32 = arith.constant 4 : i32
    %24 = vector.broadcast %c4_i32 : i32 to vector<4x512xi32>
    %25 = arith.select %23, %3, %24 : vector<4x512xi1>, vector<4x512xi32>
    %cst_12 = arith.constant dense<2147483647> : vector<512xi32>
    %26 = vector.multi_reduction <minsi>, %25, %cst_12 [0] : vector<4x512xi32> to vector<512xi32>
    %27 = vector.shape_cast %26 : vector<512xi32> to vector<1x512xi32>
    %c0_13 = arith.constant 0 : index
    %c0_14 = arith.constant 0 : index
    %28 = vector.load %arg4[%c0_13, %c0_14] : memref<1x512xi32, #tpu.memory_space<vmem>>, vector<1x512xi32>
    tpu.vector_store %arg4[%c0_13, %c0_14], %27 {strides = array<i32>} : memref<1x512xi32, #tpu.memory_space<vmem>>, vector<1x512xi32>,
    return
  }
  func.func @transform_0(%arg0: i32) -> (i32, i32) {
    %c0_i32 = arith.constant 0 : i32
    %c0_i32_0 = arith.constant 0 : i32
    return %c0_i32, %arg0 : i32, i32
  }
  func.func @transform_1(%arg0: i32) -> (i32, i32) {
    %c0_i32 = arith.constant 0 : i32
    %c0_i32_0 = arith.constant 0 : i32
    return %c0_i32, %arg0 : i32, i32
  }
  func.func @transform_2(%arg0: i32) -> (i32, i32) {
    %c0_i32 = arith.constant 0 : i32
    %c0_i32_0 = arith.constant 0 : i32
    %c0_i32_1 = arith.constant 0 : i32
    return %c0_i32, %c0_i32_0 : i32, i32
  }
  func.func @transform_3(%arg0: i32) -> (i32, i32) {
    %c0_i32 = arith.constant 0 : i32
    %c0_i32_0 = arith.constant 0 : i32
    return %c0_i32, %arg0 : i32, i32
  }
  func.func @transform_4(%arg0: i32) -> (i32, i32) {
    %c0_i32 = arith.constant 0 : i32
    %c0_i32_0 = arith.constant 0 : i32
    return %c0_i32, %arg0 : i32, i32
  }
  func.func @transform_5(%arg0: i32) -> (i32, i32) {
    %c0_i32 = arith.constant 0 : i32
    %c0_i32_0 = arith.constant 0 : i32
    return %c0_i32, %arg0 : i32, i32
  }
}

</mosaic_0001>

<llo_original>
// kernel: tpu_custom_call.1
$region0: #{tpu_custom_call.1}
  #allocation0 [shape = 'u32[]', space=smem, size = 0x4, offset = 0x4, fixed_abs, tag = 'smem constant byte address 0x4 - core index']
  #allocation1 [shape = 'u32[144,128]{1,0:T(1,128)}', space=vmem, size = 0x12000, scoped, tag = 'internal scratch']
  %s0 = inlined_call_operand.hbm [shape: f32[4,512], index: 0, kind: input, shape index: {}]
  %s1 = inlined_call_operand.vmem [shape: s32[1,512], index: 1, kind: input, shape index: {}]
  %s2 = inlined_call_operand.vmem [shape: f32[4,1], index: 2, kind: input, shape index: {}]
  %s3 = inlined_call_operand.hbm [shape: s32[1,512], index: 3, kind: output, shape index: {0}]
  %s4 = inlined_call_operand.hbm [shape: f32[1,512], index: 4, kind: output, shape index: {1}]
  %s5 = inlined_call_operand.hbm [shape: f32[1,512], index: 5, kind: output, shape index: {2}]
  %6 = xla_tuple %s3, %s4, %s5
  %s7 = sld [smem:[#allocation0]]
  $region42: #{tpu_custom_call.1} parent=0
    _
  %s9 = ssub.s32 1, %s7
  %s10 = scalar_select 0, %s9, %s7
  $region1: #{tpu_custom_call.1} parent=0
    #allocation2 [shape = 'u8[8192]{0}', space=vmem, size = 0x2000, scoped, tag = 'input window, operand 0, single buffered']
    #allocation3 [shape = 's32[1]{0}', space=sflag, size = 0x4, scoped, tag = 'scoped memory for tpu_custom_call.1']
    #allocation4 [shape = 's32[1]{0}', space=sflag, size = 0x4, scoped, tag = 'scoped memory for tpu_custom_call.1']
    #allocation5 [shape = 'u8[2048]{0}', space=vmem, size = 0x800, scoped, tag = 'output window, operand 0, single buffered']
    #allocation6 [shape = 'u8[2048]{0}', space=vmem, size = 0x800, scoped, tag = 'output window, operand 1, single buffered']
    #allocation7 [shape = 's32[1]{0}', space=sflag, size = 0x4, scoped, tag = 'scoped memory for tpu_custom_call.1']
    #allocation8 [shape = 'u8[2048]{0}', space=vmem, size = 0x800, scoped, tag = 'output window, operand 2, single buffered']
    %11 = vsyncpa [#allocation3], 0
    %12 = vsyncpa [#allocation4], 0
    %13 = vsyncpa [#allocation7], 0
    // Predicated region
    $region2: #{tpu_custom_call.1} parent=1 // pred_check
      _
    $region3: #{tpu_custom_call.1} parent=1 // pred_check_branch
      %15 = sbr.rel (0) target = $region5
    $region4: #{tpu_custom_call.1} parent=1 // pred_region
      %s17 = ssub.s32 256, 256
      %18 = vsyncadd [#allocation3], %s17
      %s20 = sshll.u32 [#allocation2], 4
      %s21 = int_to_ptr.vmem [resolvable:$true] %s20
      %23 = dma.hbm_to_vmem [thread:$0]  %s0, 256, %s21, [#allocation3]
    $region5: #{tpu_custom_call.1} parent=1 // pred_fallthru
      _
    // Predicated region
    $region6: #{tpu_custom_call.1} parent=1 // pred_check
      _
    $region7: #{tpu_custom_call.1} parent=1 // pred_check_branch
      %25 = sbr.rel (0) target = $region9
    $region8: #{tpu_custom_call.1} parent=1 // pred_region
      _
    $region9: #{tpu_custom_call.1} parent=1 // pred_fallthru
      _
    // Predicated region
    $region10: #{tpu_custom_call.1} parent=1 // pred_check
      _
    $region11: #{tpu_custom_call.1} parent=1 // pred_check_branch
      %27 = sbr.rel (0) target = $region13
    $region12: #{tpu_custom_call.1} parent=1 // pred_region
      _
    $region13: #{tpu_custom_call.1} parent=1 // pred_fallthru
      _
    // Predicated region
    $region14: #{tpu_custom_call.1} parent=1 // pred_check
      _
    $region15: #{tpu_custom_call.1} parent=1 // pred_check_branch
      %29 = sbr.rel (0) target = $region17
    $region16: #{tpu_custom_call.1} parent=1 // pred_region
      %30 = dma.done [#allocation3], 256
    $region17: #{tpu_custom_call.1} parent=1 // pred_fallthru
      _
    %v31 = vld [vmem:[#allocation2] sm:$0xff]
    %v32 = vld [vmem:[#allocation2 + $0x8] sm:$0xff]
    %v33 = vld [vmem:[%s1] sm:$0xf]
    %v34 = vld [vmem:[%s2] sm:$0xf]
    %v35 = vlaneseq
    %v36 = vshrl.u32 %v35, 7
    %v37 = vlaneseq
    %v38 = vshrl.u32 %v37, 7
    %v39 = vsub.s32 0, %v38
    %v40 = vrot.slane %v33, %v39
    %v41 = vlaneseq
    %v42 = vshrl.u32 %v41, 7
    %v43 = vsub.s32 1, %v42
    %v44 = vrot.slane %v33, %v43
    %v45 = vlaneseq
    %v46 = vshrl.u32 %v45, 7
    %v47 = vsub.s32 2, %v46
    %v48 = vrot.slane %v33, %v47
    %v49 = vlaneseq
    %v50 = vshrl.u32 %v49, 7
    %v51 = vsub.s32 3, %v50
    %v52 = vrot.slane %v33, %v51
    %vm53 = vcmp.eq.s32.totalorder %v36, %v40
    %vm54 = vcmp.eq.s32.totalorder %v36, %v44
    %vm55 = vcmp.eq.s32.totalorder %v36, %v48
    %vm56 = vcmp.eq.s32.totalorder %v36, %v52
    %v57 = vsel %vm53, 1, 0
    %v58 = vsel %vm54, 1, 0
    %v59 = vsel %vm55, 1, 0
    %v60 = vsel %vm56, 1, 0
    %v61 = vcvt.s32.f32 %v57
    %v62 = vcvt.s32.f32 %v58
    %v63 = vcvt.s32.f32 %v59
    %v64 = vcvt.s32.f32 %v60
    %v69 = vcombine.low %v61, %v62
    %v70 = vcombine.low %v63, %v64
    %v73 = vmul.f32 %v31, %v69
    %v74 = vmul.f32 %v32, %v70
    %v77 = vcombine.high %v73, %v73
    %v78 = vcombine.high %v74, %v74
    %vm81 = vcmask 1043456
    %v82 = vsel %vm81, %v73, 0.0
    %v83 = vrot.slane %v82, 4
    %v84 = vadd.f32 %v82, %v83
    %v85 = vrot.slane %v84, 2
    %v86 = vadd.f32 %v84, %v85
    %v87 = vrot.slane %v86, 1
    %v88 = vadd.f32 %v86, %v87
    %v89 = vsel %vm81, %v77, 0.0
    %v90 = vrot.slane %v89, 4
    %v91 = vadd.f32 %v89, %v90
    %v92 = vrot.slane %v91, 2
    %v93 = vadd.f32 %v91, %v92
    %v94 = vrot.slane %v93, 1
    %v95 = vadd.f32 %v93, %v94
    %v96 = vsel %vm81, %v74, 0.0
    %v97 = vrot.slane %v96, 4
    %v98 = vadd.f32 %v96, %v97
    %v99 = vrot.slane %v98, 2
    %v100 = vadd.f32 %v98, %v99
    %v101 = vrot.slane %v100, 1
    %v102 = vadd.f32 %v100, %v101
    %v103 = vsel %vm81, %v78, 0.0
    %v104 = vrot.slane %v103, 4
    %v105 = vadd.f32 %v103, %v104
    %v106 = vrot.slane %v105, 2
    %v107 = vadd.f32 %v105, %v106
    %v108 = vrot.slane %v107, 1
    %v109 = vadd.f32 %v107, %v108
    %111 = vset.pattern.permute.xlu0 0
    %112 = vperm.xlu0 %111, %v34
    %v113 = vpop.permute.xlu0 %112
    %v115 = vmul.f32 %v113, %v61
    %v116 = vmul.f32 %v113, %v62
    %v117 = vmul.f32 %v113, %v63
    %v118 = vmul.f32 %v113, %v64
    %v119 = vsel %vm81, %v115, 0.0
    %v120 = vrot.slane %v119, 4
    %v121 = vadd.f32 %v119, %v120
    %v122 = vrot.slane %v121, 2
    %v123 = vadd.f32 %v121, %v122
    %v124 = vrot.slane %v123, 1
    %v125 = vadd.f32 %v123, %v124
    %v126 = vsel %vm81, %v116, 0.0
    %v127 = vrot.slane %v126, 4
    %v128 = vadd.f32 %v126, %v127
    %v129 = vrot.slane %v128, 2
    %v130 = vadd.f32 %v128, %v129
    %v131 = vrot.slane %v130, 1
    %v132 = vadd.f32 %v130, %v131
    %v133 = vsel %vm81, %v117, 0.0
    %v134 = vrot.slane %v133, 4
    %v135 = vadd.f32 %v133, %v134
    %v136 = vrot.slane %v135, 2
    %v137 = vadd.f32 %v135, %v136
    %v138 = vrot.slane %v137, 1
    %v139 = vadd.f32 %v137, %v138
    %v140 = vsel %vm81, %v118, 0.0
    %v141 = vrot.slane %v140, 4
    %v142 = vadd.f32 %v140, %v141
    %v143 = vrot.slane %v142, 2
    %v144 = vadd.f32 %v142, %v143
    %v145 = vrot.slane %v144, 1
    %v146 = vadd.f32 %v144, %v145
    %v147 = vmul.f32 %v125, %v88
    %v148 = vmul.f32 %v132, %v95
    %v149 = vmul.f32 %v139, %v102
    %v150 = vmul.f32 %v146, %v109
    %v151 = vsub.f32 0.0, %v147
    %v152 = vsub.f32 0.0, %v148
    %v153 = vsub.f32 0.0, %v149
    %v154 = vsub.f32 0.0, %v150
    %v159 = vcombine.low %v151, %v152
    %v160 = vcombine.low %v153, %v154
    %v162 = vunpack.c.l.s4 1966171168
    %v163 = vunpack.c.0.s8 %v162
    %v164 = vlaneseq
    %v165 = vshrl.u32 %v164, 7
    %v166 = vsub.s32 %v163, %v165
    %v167 = vrot.slane %v159, %v166
    %v169 = vunpack.c.l.s4 1966171168
    %v170 = vunpack.c.0.s8 %v169
    %v171 = vlaneseq
    %v172 = vshrl.u32 %v171, 7
    %v173 = vsub.s32 %v170, %v172
    %v174 = vrot.slane %v160, %v173
    %v175 = vcombine.low %v167, %v174
    %v177 = vunpack.c.l.s4 1966171168
    %v178 = vunpack.c.0.s8 %v177
    %v179 = vlaneseq
    %v180 = vshrl.u32 %v179, 7
    %v181 = vsub.s32 %v178, %v180
    %v182 = vrot.slane %v175, %v181
    %v184 = vlaneseq
    %vm185 = vcmp.ge.s32.totalorder %v184, 0
    %vm186 = vcmp.lt.s32.totalorder %v184, 512
    %vm187 = vmand %vm185, %vm186
    %188 = vst.msk [vmem:[#allocation6] sm:$0xf] %vm187, %v182
    %v193 = vcombine.low %v125, %v132
    %v194 = vcombine.low %v139, %v146
    %v196 = vunpack.c.l.s4 1966171168
    %v197 = vunpack.c.0.s8 %v196
    %v198 = vlaneseq
    %v199 = vshrl.u32 %v198, 7
    %v200 = vsub.s32 %v197, %v199
    %v201 = vrot.slane %v193, %v200
    %v203 = vunpack.c.l.s4 1966171168
    %v204 = vunpack.c.0.s8 %v203
    %v205 = vlaneseq
    %v206 = vshrl.u32 %v205, 7
    %v207 = vsub.s32 %v204, %v206
    %v208 = vrot.slane %v194, %v207
    %v209 = vcombine.low %v201, %v208
    %v211 = vunpack.c.l.s4 1966171168
    %v212 = vunpack.c.0.s8 %v211
    %v213 = vlaneseq
    %v214 = vshrl.u32 %v213, 7
    %v215 = vsub.s32 %v212, %v214
    %v216 = vrot.slane %v209, %v215
    %218 = vst.msk [vmem:[#allocation8] sm:$0xf] %vm187, %v216
    %v221 = vcombine.high %v31, %v31
    %v222 = vcombine.high %v32, %v32
    %v225 = vsel %vm81, %v31, -inf
    %v226 = vrot.slane %v225, 4
    %v227 = vmax.f32 %v225, %v226
    %v228 = vrot.slane %v227, 2
    %v229 = vmax.f32 %v227, %v228
    %v230 = vrot.slane %v229, 1
    %v231 = vmax.f32 %v229, %v230
    %v232 = vsel %vm81, %v221, -inf
    %v233 = vrot.slane %v232, 4
    %v234 = vmax.f32 %v232, %v233
    %v235 = vrot.slane %v234, 2
    %v236 = vmax.f32 %v234, %v235
    %v237 = vrot.slane %v236, 1
    %v238 = vmax.f32 %v236, %v237
    %v239 = vsel %vm81, %v32, -inf
    %v240 = vrot.slane %v239, 4
    %v241 = vmax.f32 %v239, %v240
    %v242 = vrot.slane %v241, 2
    %v243 = vmax.f32 %v241, %v242
    %v244 = vrot.slane %v243, 1
    %v245 = vmax.f32 %v243, %v244
    %v246 = vsel %vm81, %v222, -inf
    %v247 = vrot.slane %v246, 4
    %v248 = vmax.f32 %v246, %v247
    %v249 = vrot.slane %v248, 2
    %v250 = vmax.f32 %v248, %v249
    %v251 = vrot.slane %v250, 1
    %v252 = vmax.f32 %v250, %v251
    %v257 = vcombine.low %v231, %v238
    %v258 = vcombine.low %v245, %v252
    %vm261 = vcmp.eq.f32.partialorder %v31, %v257
    %vm262 = vcmp.eq.f32.partialorder %v32, %v258
    %v264 = vunpack.c.l.s4 839922192
    %v265 = vunpack.c.0.s8 %v264
    %v266 = vlaneseq
    %v267 = vshrl.u32 %v266, 7
    %v268 = vsub.s32 %v265, %v267
    %v269 = vrot.slane %v36, %v268
    %v270 = vsel %vm261, %v269, 4
    %v271 = vsel %vm262, %v269, 4
    %v272 = vcombine.high %v270, %v270
    %v273 = vcombine.high %v271, %v271
    %v274 = vsel %vm81, %v270, 2147483647
    %v275 = vrot.slane %v274, 4
    %vm276 = vcmp.lt.s32.totalorder %v274, %v275
    %v277 = vsel %vm276, %v274, %v275
    %v278 = vrot.slane %v277, 2
    %vm279 = vcmp.lt.s32.totalorder %v277, %v278
    %v280 = vsel %vm279, %v277, %v278
    %v281 = vrot.slane %v280, 1
    %vm282 = vcmp.lt.s32.totalorder %v280, %v281
    %v283 = vsel %vm282, %v280, %v281
    %v284 = vsel %vm81, %v272, 2147483647
    %v285 = vrot.slane %v284, 4
    %vm286 = vcmp.lt.s32.totalorder %v284, %v285
    %v287 = vsel %vm286, %v284, %v285
    %v288 = vrot.slane %v287, 2
    %vm289 = vcmp.lt.s32.totalorder %v287, %v288
    %v290 = vsel %vm289, %v287, %v288
    %v291 = vrot.slane %v290, 1
    %vm292 = vcmp.lt.s32.totalorder %v290, %v291
    %v293 = vsel %vm292, %v290, %v291
    %v294 = vsel %vm81, %v271, 2147483647
    %v295 = vrot.slane %v294, 4
    %vm296 = vcmp.lt.s32.totalorder %v294, %v295
    %v297 = vsel %vm296, %v294, %v295
    %v298 = vrot.slane %v297, 2
    %vm299 = vcmp.lt.s32.totalorder %v297, %v298
    %v300 = vsel %vm299, %v297, %v298
    %v301 = vrot.slane %v300, 1
    %vm302 = vcmp.lt.s32.totalorder %v300, %v301
    %v303 = vsel %vm302, %v300, %v301
    %v304 = vsel %vm81, %v273, 2147483647
    %v305 = vrot.slane %v304, 4
    %vm306 = vcmp.lt.s32.totalorder %v304, %v305
    %v307 = vsel %vm306, %v304, %v305
    %v308 = vrot.slane %v307, 2
    %vm309 = vcmp.lt.s32.totalorder %v307, %v308
    %v310 = vsel %vm309, %v307, %v308
    %v311 = vrot.slane %v310, 1
    %vm312 = vcmp.lt.s32.totalorder %v310, %v311
    %v313 = vsel %vm312, %v310, %v311
    %v314 = vcombine.low %v283, %v293
    %v315 = vcombine.low %v303, %v313
    %v317 = vunpack.c.l.s4 1966171168
    %v318 = vunpack.c.0.s8 %v317
    %v319 = vlaneseq
    %v320 = vshrl.u32 %v319, 7
    %v321 = vsub.s32 %v318, %v320
    %v322 = vrot.slane %v314, %v321
    %v324 = vunpack.c.l.s4 1966171168
    %v325 = vunpack.c.0.s8 %v324
    %v326 = vlaneseq
    %v327 = vshrl.u32 %v326, 7
    %v328 = vsub.s32 %v325, %v327
    %v329 = vrot.slane %v315, %v328
    %v330 = vcombine.low %v322, %v329
    %v332 = vunpack.c.l.s4 1966171168
    %v333 = vunpack.c.0.s8 %v332
    %v334 = vlaneseq
    %v335 = vshrl.u32 %v334, 7
    %v336 = vsub.s32 %v333, %v335
    %v337 = vrot.slane %v330, %v336
    %338 = vst.msk [vmem:[#allocation5] sm:$0xf] %vm187, %v337
    // Predicated region
    $region18: #{tpu_custom_call.1} parent=1 // pred_check
      _
    $region19: #{tpu_custom_call.1} parent=1 // pred_check_branch
      %340 = sbr.rel (0) target = $region21
    $region20: #{tpu_custom_call.1} parent=1 // pred_region
      %s342 = ssub.s32 64, 64
      %343 = vsyncadd [#allocation4], %s342
      %s345 = sshll.u32 [#allocation5], 4
      %s346 = int_to_ptr.vmem [resolvable:$true] %s345
      %348 = dma.vmem_to_hbm [thread:$0]  %s346, 64, %s3, [#allocation4]
    $region21: #{tpu_custom_call.1} parent=1 // pred_fallthru
      _
    // Predicated region
    $region22: #{tpu_custom_call.1} parent=1 // pred_check
      _
    $region23: #{tpu_custom_call.1} parent=1 // pred_check_branch
      %350 = sbr.rel (0) target = $region25
    $region24: #{tpu_custom_call.1} parent=1 // pred_region
      %s352 = ssub.s32 64, 64
      %353 = vsyncadd [#allocation7], %s352
      %s355 = sshll.u32 [#allocation6], 4
      %s356 = int_to_ptr.vmem [resolvable:$true] %s355
      %358 = dma.vmem_to_hbm [thread:$0]  %s356, 64, %s4, [#allocation7]
    $region25: #{tpu_custom_call.1} parent=1 // pred_fallthru
      _
    // Predicated region
    $region26: #{tpu_custom_call.1} parent=1 // pred_check
      _
    $region27: #{tpu_custom_call.1} parent=1 // pred_check_branch
      %360 = sbr.rel (0) target = $region29
    $region28: #{tpu_custom_call.1} parent=1 // pred_region
      %s362 = ssub.s32 64, 64
      %363 = vsyncadd [#allocation7], %s362
      %s365 = sshll.u32 [#allocation8], 4
      %s366 = int_to_ptr.vmem [resolvable:$true] %s365
      %368 = dma.vmem_to_hbm [thread:$0]  %s366, 64, %s5, [#allocation7]
    $region29: #{tpu_custom_call.1} parent=1 // pred_fallthru
      _
    // Predicated region
    $region30: #{tpu_custom_call.1} parent=1 // pred_check
      _
    $region31: #{tpu_custom_call.1} parent=1 // pred_check_branch
      %370 = sbr.rel (0) target = $region33
    $region32: #{tpu_custom_call.1} parent=1 // pred_region
      %371 = dma.done [#allocation4], 64
    $region33: #{tpu_custom_call.1} parent=1 // pred_fallthru
      _
    // Predicated region
    $region34: #{tpu_custom_call.1} parent=1 // pred_check
      _
    $region35: #{tpu_custom_call.1} parent=1 // pred_check_branch
      %373 = sbr.rel (0) target = $region37
    $region36: #{tpu_custom_call.1} parent=1 // pred_region
      %374 = dma.done [#allocation7], 64
    $region37: #{tpu_custom_call.1} parent=1 // pred_fallthru
      _
    // Predicated region
    $region38: #{tpu_custom_call.1} parent=1 // pred_check
      _
    $region39: #{tpu_custom_call.1} parent=1 // pred_check_branch
      %376 = sbr.rel (0) target = $region41
    $region40: #{tpu_custom_call.1} parent=1 // pred_region
      %377 = dma.done [#allocation7], 64
    $region41: #{tpu_custom_call.1} parent=1 // pred_fallthru
      _
    %378 = vsyncpa [#allocation3], 1
    %379 = vsyncpa [#allocation4], 1
    %380 = vsyncpa [#allocation7], 1

</llo_original>
